<compile_context>
chip_gen: v7x
topology: tpu7x:2x2x1
jax: 0.10.0
libtpu: 0.0.40
codegen_flags: <defaults>
</compile_context>

<pallas_src>
import functools

import jax
import jax.numpy as jnp
from jax.experimental import pallas as pl
from jax.experimental.pallas import tpu as pltpu

EPS = 1e-5
LANE = 128
VMEM_LIMIT_BYTES = 48 * 1024 * 1024  # leaves headroom under v7x's 64 MiB physical VMEM


# --------------------------------------------------------------------------- #
# Kernels
# --------------------------------------------------------------------------- #
def _stats_kernel(x_ref, w1_ref, sum_ref, sumsq_ref):
    """Pass 1: accumulate per-feature sum / sum-of-squares of h = x @ W1."""
    h = jnp.dot(x_ref[...], w1_ref[...], preferred_element_type=jnp.float32)

    @pl.when(pl.program_id(0) == 0)
    def _():
        sum_ref[...] = jnp.zeros_like(sum_ref)
        sumsq_ref[...] = jnp.zeros_like(sumsq_ref)

    # Single pass over h: both reductions from the same tile.
    sum_ref[...] += jnp.sum(h, axis=0, keepdims=True)
    sumsq_ref[...] += jnp.sum(h * h, axis=0, keepdims=True)


def _apply_kernel(x_ref, w1_ref, gamma_ref, beta_ref, sum_ref, sumsq_ref,
                  w2_ref, b2_ref, o_ref, *, batch_size):
    """Pass 2: recompute h = x @ W1, folded BN + ReLU, y = h @ W2 + b2."""
    h = jnp.dot(x_ref[...], w1_ref[...], preferred_element_type=jnp.float32)

    # Folded BN (per-feature rows, recomputed cheaply per tile; rsqrt is EUP).
    inv_n = 1.0 / batch_size
    mean = sum_ref[...] * inv_n
    var = sumsq_ref[...] * inv_n - mean * mean          # biased (training-mode) variance
    inv_std = jax.lax.rsqrt(var + EPS)
    scale = gamma_ref[...] * inv_std
    shift = beta_ref[...] - mean * scale

    h = jnp.maximum(h * scale + shift, 0.0)             # 2 VPU ops/elt + ReLU
    y = jnp.dot(h.astype(w2_ref.dtype), w2_ref[...],
                preferred_element_type=jnp.float32) + b2_ref[...]
    o_ref[...] = y.astype(o_ref.dtype)


# --------------------------------------------------------------------------- #
# Wrapper
# --------------------------------------------------------------------------- #
def _pad_axis(a, axis, multiple):
    pad = (-a.shape[axis]) % multiple
    if pad == 0:
        return a
    widths = [(0, 0)] * a.ndim
    widths[axis] = (0, pad)
    return jnp.pad(a, widths)


def _pick_batch_tile(batch, requested):
    if requested is not None and batch % requested == 0:
        return min(requested, batch)
    for t in (512, 256, 128, 64, 32, 16, 8):
        if batch % t == 0:
            return t
    return batch  # full-extent block is always legal


def moby_mlp_forward(x, w1, b1, gamma, beta, w2, b2, *,
                     batch_tile=256, compute_dtype=jnp.bfloat16, out_dtype=None):
    """MoBYMLP(num_layers=2) forward (training-mode BatchNorm1d).

    x:     (B, in_dim)
    w1:    (in_dim, inner_dim)   nn.Linear weight, pre-transposed
    b1:    (inner_dim,)          accepted for API parity; mathematically cancels in BN
    gamma: (inner_dim,)          BatchNorm1d weight
    beta:  (inner_dim,)          BatchNorm1d bias
    w2:    (inner_dim, out_dim)  nn.Linear weight, pre-transposed
    b2:    (out_dim,)
    """
    del b1  # per-feature constant before training-mode BN is a mathematical no-op
    B, in_dim = x.shape
    inner_dim = w1.shape[1]
    out_dim = w2.shape[1]
    assert w1.shape[0] == in_dim and w2.shape[0] == inner_dim
    out_dtype = out_dtype or x.dtype

    # Zero-pad feature dims to lane multiples (exact: padded h-features get
    # gamma=beta=0 -> scale=shift=0 -> contribute nothing; padded out cols sliced).
    xp = _pad_axis(x, 1, LANE).astype(compute_dtype)
    w1p = _pad_axis(_pad_axis(w1, 0, LANE), 1, LANE).astype(compute_dtype)
    w2p = _pad_axis(_pad_axis(w2, 0, LANE), 1, LANE).astype(compute_dtype)
    gammap = _pad_axis(gamma.reshape(1, -1), 1, LANE).astype(jnp.float32)
    betap = _pad_axis(beta.reshape(1, -1), 1, LANE).astype(jnp.float32)
    b2p = _pad_axis(b2.reshape(1, -1), 1, LANE).astype(jnp.float32)

    in_p, inner_p, out_p = xp.shape[1], w1p.shape[1], w2p.shape[1]

    tb = _pick_batch_tile(B, batch_tile)
    nb = B // tb

    params_reduce = pltpu.CompilerParams(
        dimension_semantics=("arbitrary",), vmem_limit_bytes=VMEM_LIMIT_BYTES)
    params_parallel = pltpu.CompilerParams(
        dimension_semantics=("parallel",), vmem_limit_bytes=VMEM_LIMIT_BYTES)

    row_spec = pl.BlockSpec((1, inner_p), lambda i: (0, 0))

    # ---- pass 1: batch statistics of h = x @ W1 ----------------------------
    h_sum, h_sumsq = pl.pallas_call(
        _stats_kernel,
        out_shape=(jax.ShapeDtypeStruct((1, inner_p), jnp.float32),
                   jax.ShapeDtypeStruct((1, inner_p), jnp.float32)),
        grid=(nb,),
        in_specs=[pl.BlockSpec((tb, in_p), lambda i: (i, 0)),        # x tile
                  pl.BlockSpec((in_p, inner_p), lambda i: (0, 0))],  # W1 (resident)
        out_specs=(row_spec, row_spec),
        compiler_params=params_reduce,
    )(xp, w1p)

    # ---- pass 2: normalize + ReLU + second linear ---------------------------
    y = pl.pallas_call(
        functools.partial(_apply_kernel, batch_size=B),
        out_shape=jax.ShapeDtypeStruct((B, out_p), out_dtype),
        grid=(nb,),
        in_specs=[pl.BlockSpec((tb, in_p), lambda i: (i, 0)),        # x tile
                  pl.BlockSpec((in_p, inner_p), lambda i: (0, 0)),   # W1 (resident)
                  row_spec,                                          # gamma
                  row_spec,                                          # beta
                  row_spec,                                          # sum(h)
                  row_spec,                                          # sum(h^2)
                  pl.BlockSpec((inner_p, out_p), lambda i: (0, 0)),  # W2 (resident)
                  pl.BlockSpec((1, out_p), lambda i: (0, 0))],       # b2
        out_specs=pl.BlockSpec((tb, out_p), lambda i: (i, 0)),
        compiler_params=params_parallel,
    )(xp, w1p, gammap, betap, h_sum, h_sumsq, w2p, b2p)

    return y[:, :out_dim] if out_p != out_dim else y


# --------------------------------------------------------------------------- #
# Reference & demo
# --------------------------------------------------------------------------- #
def reference_forward(x, w1, b1, gamma, beta, w2, b2, matmul_dtype=None):
    """Pure-JAX reference of the PyTorch module (training-mode BatchNorm1d).

    If matmul_dtype is given, matmul operands are cast to it (matching the
    kernel's compute_dtype) while accumulation / BN statistics stay in f32.
    """
    cast = (lambda a: a.astype(matmul_dtype)) if matmul_dtype is not None else (lambda a: a)
    dot = functools.partial(jnp.dot, preferred_element_type=jnp.float32,
                            precision=jax.lax.Precision.HIGHEST)
    h = dot(cast(x), cast(w1)) + b1
    mean = jnp.mean(h, axis=0, keepdims=True)
    var = jnp.mean((h - mean) ** 2, axis=0, keepdims=True)  # biased, as in training mode
    h = (h - mean) * jax.lax.rsqrt(var + EPS) * gamma + beta
    h = jnp.maximum(h, 0.0)
    return dot(cast(h), cast(w2)) + b2


if __name__ == "__main__":
    # Small shapes consistent with MoBYMLP's structure. Feature dims are
    # deliberately NOT lane-aligned so the padding path is exercised; batch_tile
    # = 128 gives a 2-step grid so the pass-1 accumulator path is exercised too.
    B, in_dim, inner_dim, out_dim = 256, 96, 192, 80

    key = jax.random.PRNGKey(0)
    kx, kw1, kb1, kg, kbt, kw2, kb2 = jax.random.split(key, 7)

    x = jax.random.normal(kx, (B, in_dim), dtype=jnp.float32)
    w1 = 0.05 * jax.random.normal(kw1, (in_dim, inner_dim), dtype=jnp.float32)
    b1 = 0.05 * jax.random.normal(kb1, (inner_dim,), dtype=jnp.float32)
    gamma = 1.0 + 0.1 * jax.random.normal(kg, (inner_dim,), dtype=jnp.float32)
    beta = 0.1 * jax.random.normal(kbt, (inner_dim,), dtype=jnp.float32)
    w2 = 0.05 * jax.random.normal(kw2, (inner_dim, out_dim), dtype=jnp.float32)
    b2 = 0.05 * jax.random.normal(kb2, (out_dim,), dtype=jnp.float32)

    out = jax.block_until_ready(
        moby_mlp_forward(x, w1, b1, gamma, beta, w2, b2, batch_tile=128))
    assert out.shape == (B, out_dim), out.shape

    # Structural check vs a matched-precision (bf16-operand, f32-accum) reference.
    ref_matched = reference_forward(x, w1, b1, gamma, beta, w2, b2,
                                    matmul_dtype=jnp.bfloat16)
    err_matched = float(jnp.max(jnp.abs(out - ref_matched)))
    assert jnp.allclose(out, ref_matched, atol=5e-3, rtol=5e-3), err_matched

    # bf16-fidelity sanity check vs the full-precision f32 reference.
    ref_f32 = reference_forward(x, w1, b1, gamma, beta, w2, b2)
    err_f32 = float(jnp.max(jnp.abs(out - ref_f32)))
    assert jnp.allclose(out, ref_f32, atol=7e-2, rtol=7e-2), err_f32

    print("KERNEL_OK")
</pallas_src>

<mosaic_0001>
module attributes {stable_mosaic.version = 11 : i64} {
  func.func @_stats_kernel(%arg0: i32, %arg1: memref<128x128xbf16, #tpu.memory_space<vmem>>, %arg2: memref<128x256xbf16, #tpu.memory_space<vmem>>, %arg3: memref<1x256xf32, #tpu.memory_space<vmem>>, %arg4: memref<1x256xf32, #tpu.memory_space<vmem>>) attributes {dimension_semantics = [#tpu.dimension_semantics<arbitrary>], iteration_bounds = array<i64: 2>, scalar_prefetch = 0 : i64, scratch_operands = 0 : i64, tpu.core_type = #tpu.core_type<tc>, window_params = [{transform_indices = @transform_0, window_bounds = array<i64: 128, 128>}, {pipeline_mode = #tpu.pipeline_mode<synchronous>, transform_indices = @transform_1, window_bounds = array<i64: 128, 256>}, {pipeline_mode = #tpu.pipeline_mode<synchronous>, transform_indices = @transform_2, window_bounds = array<i64: 1, 256>}, {pipeline_mode = #tpu.pipeline_mode<synchronous>, transform_indices = @transform_3, window_bounds = array<i64: 1, 256>}]} {
    %c0 = arith.constant 0 : index
    %c0_0 = arith.constant 0 : index
    %0 = vector.load %arg1[%c0, %c0_0] : memref<128x128xbf16, #tpu.memory_space<vmem>>, vector<128x128xbf16>
    %c0_1 = arith.constant 0 : index
    %c0_2 = arith.constant 0 : index
    %1 = vector.load %arg2[%c0_1, %c0_2] : memref<128x256xbf16, #tpu.memory_space<vmem>>, vector<128x256xbf16>
    %cst = arith.constant dense<0.000000e+00> : vector<128x256xf32>
    %2 = tpu.matmul %0, %1, %cst {dimension_numbers = #tpu.dot_dimension_numbers<[1], [0], [0], [1], [0, 0, 1, 1], [], []>} : vector<128x128xbf16>, vector<128x256xbf16>, vector<128x256xf32> -> vector<128x256xf32>
    %c0_i32 = arith.constant 0 : i32
    %3 = arith.cmpi eq, %arg0, %c0_i32 : i32
    %4 = arith.extui %3 : i1 to i32
    %c0_i32_3 = arith.constant 0 : i32
    %5 = arith.cmpi ne, %4, %c0_i32_3 : i32
    scf.if %5 {
      %cst_14 = arith.constant 0.000000e+00 : f32
      %17 = vector.broadcast %cst_14 : f32 to vector<1x256xf32>
      %c0_15 = arith.constant 0 : index
      %c0_16 = arith.constant 0 : index
      %18 = vector.load %arg3[%c0_15, %c0_16] : memref<1x256xf32, #tpu.memory_space<vmem>>, vector<1x256xf32>
      tpu.vector_store %arg3[%c0_15, %c0_16], %17 {strides = array<i32>} : memref<1x256xf32, #tpu.memory_space<vmem>>, vector<1x256xf32>,
      %cst_17 = arith.constant 0.000000e+00 : f32
      %19 = vector.broadcast %cst_17 : f32 to vector<1x256xf32>
      %c0_18 = arith.constant 0 : index
      %c0_19 = arith.constant 0 : index
      %20 = vector.load %arg4[%c0_18, %c0_19] : memref<1x256xf32, #tpu.memory_space<vmem>>, vector<1x256xf32>
      tpu.vector_store %arg4[%c0_18, %c0_19], %19 {strides = array<i32>} : memref<1x256xf32, #tpu.memory_space<vmem>>, vector<1x256xf32>,
    } else {
    }
    %c0_4 = arith.constant 0 : index
    %c0_5 = arith.constant 0 : index
    %6 = vector.load %arg3[%c0_4, %c0_5] : memref<1x256xf32, #tpu.memory_space<vmem>>, vector<1x256xf32>
    %cst_6 = arith.constant dense<0.000000e+00> : vector<256xf32>
    %7 = vector.multi_reduction <add>, %2, %cst_6 [0] : vector<128x256xf32> to vector<256xf32>
    %8 = vector.shape_cast %7 : vector<256xf32> to vector<1x256xf32>
    %9 = arith.addf %6, %8 : vector<1x256xf32>
    %c0_7 = arith.constant 0 : index
    %c0_8 = arith.constant 0 : index
    %10 = vector.load %arg3[%c0_7, %c0_8] : memref<1x256xf32, #tpu.memory_space<vmem>>, vector<1x256xf32>
    tpu.vector_store %arg3[%c0_7, %c0_8], %9 {strides = array<i32>} : memref<1x256xf32, #tpu.memory_space<vmem>>, vector<1x256xf32>,
    %c0_9 = arith.constant 0 : index
    %c0_10 = arith.constant 0 : index
    %11 = vector.load %arg4[%c0_9, %c0_10] : memref<1x256xf32, #tpu.memory_space<vmem>>, vector<1x256xf32>
    %12 = arith.mulf %2, %2 : vector<128x256xf32>
    %cst_11 = arith.constant dense<0.000000e+00> : vector<256xf32>
    %13 = vector.multi_reduction <add>, %12, %cst_11 [0] : vector<128x256xf32> to vector<256xf32>
    %14 = vector.shape_cast %13 : vector<256xf32> to vector<1x256xf32>
    %15 = arith.addf %11, %14 : vector<1x256xf32>
    %c0_12 = arith.constant 0 : index
    %c0_13 = arith.constant 0 : index
    %16 = vector.load %arg4[%c0_12, %c0_13] : memref<1x256xf32, #tpu.memory_space<vmem>>, vector<1x256xf32>
    tpu.vector_store %arg4[%c0_12, %c0_13], %15 {strides = array<i32>} : memref<1x256xf32, #tpu.memory_space<vmem>>, vector<1x256xf32>,
    return
  }
  func.func @transform_0(%arg0: i32) -> (i32, i32) {
    %c0_i32 = arith.constant 0 : i32
    %c0_i32_0 = arith.constant 0 : i32
    return %arg0, %c0_i32 : i32, i32
  }
  func.func @transform_1(%arg0: i32) -> (i32, i32) {
    %c0_i32 = arith.constant 0 : i32
    %c0_i32_0 = arith.constant 0 : i32
    %c0_i32_1 = arith.constant 0 : i32
    return %c0_i32, %c0_i32_0 : i32, i32
  }
  func.func @transform_2(%arg0: i32) -> (i32, i32) {
    %c0_i32 = arith.constant 0 : i32
    %c0_i32_0 = arith.constant 0 : i32
    %c0_i32_1 = arith.constant 0 : i32
    return %c0_i32, %c0_i32_0 : i32, i32
  }
  func.func @transform_3(%arg0: i32) -> (i32, i32) {
    %c0_i32 = arith.constant 0 : i32
    %c0_i32_0 = arith.constant 0 : i32
    %c0_i32_1 = arith.constant 0 : i32
    return %c0_i32, %c0_i32_0 : i32, i32
  }
}

</mosaic_0001>

<llo_original>
// kernel: tpu_custom_call.1
$region0: #{tpu_custom_call.1}
  #allocation0 [shape = 'u32[]', space=smem, size = 0x4, offset = 0x4, fixed_abs, tag = 'smem constant byte address 0x4 - core index']
  #allocation1 [shape = 'u32[144,128]{1,0:T(1,128)}', space=vmem, size = 0x12000, scoped, tag = 'internal scratch']
  %s0 = inlined_call_operand.hbm [shape: bf16[256,128], index: 0, kind: input, shape index: {}]
  %s1 = inlined_call_operand.hbm [shape: bf16[128,256], index: 1, kind: input, shape index: {}]
  %s2 = inlined_call_operand.hbm [shape: f32[1,256], index: 2, kind: output, shape index: {0}]
  %s3 = inlined_call_operand.hbm [shape: f32[1,256], index: 3, kind: output, shape index: {1}]
  %4 = xla_tuple %s2, %s3
  %s5 = sld [smem:[#allocation0]]
  $region61: #{tpu_custom_call.1} parent=0
    _
  %s7 = ssub.s32 1, %s5
  %s8 = scalar_select 0, %s7, %s5
  $region1: #{tpu_custom_call.1} parent=0
    #allocation2 [shape = 'u8[65536]{0}', space=vmem, size = 0x10000, scoped, tag = 'input window, operand 0']
    #allocation3 [shape = 's32[2]{0}', space=sflag, size = 0x8, scoped, tag = 'scoped memory for tpu_custom_call.1']
    #allocation4 [shape = 's32[2]{0}', space=sflag, size = 0x8, scoped, tag = 'scoped memory for tpu_custom_call.1']
    #allocation5 [shape = 'u8[65536]{0}', space=vmem, size = 0x10000, scoped, tag = 'input window, operand 1, single buffered']
    #allocation6 [shape = 's32[1]{0}', space=sflag, size = 0x4, scoped, tag = 'scoped memory for tpu_custom_call.1']
    #allocation7 [shape = 'u8[1024]{0}', space=vmem, size = 0x400, scoped, tag = 'output window, operand 0, single buffered']
    #allocation8 [shape = 'u8[1024]{0}', space=vmem, size = 0x400, scoped, tag = 'output window, operand 1, single buffered']
    #allocation9 [shape = 's32[1]{0}', space=sflag, size = 0x4, scoped, tag = 'scoped memory for tpu_custom_call.1']
    %9 = vsyncpa [#allocation3], 0
    %s10 = scalar_lea.sflag [#allocation3], 1
    %11 = vsyncpa %s10, 0
    %12 = vsyncpa [#allocation6], 0
    %13 = vsyncpa [#allocation4], 0
    %14 = vsyncpa [#allocation9], 0
    loop: start=0, step=1, limit=4
    $region2: #{tpu_custom_call.1} parent=1 // loop_pre_header
      _
    $region3: #{tpu_custom_call.1} parent=1 // loop_header
      %s16 = sphi 0, %s20
      %p17 = scmp.ge.s32.totalorder %s16, 4
      %s26 = sphi 0, %s28
      %s29 = sphi 0, %s26
      %s30 = sphi 0, %s29
      %s46 = sphi 0, %s30
      %s50 = sphi 0, %s50
      %s52 = sphi 0, %s50
      %s53 = sphi 0, %s52
      %s67 = sphi 0, %s53
      %s71 = sphi 0, %s71
      %s73 = sphi 0, %s71
      %s74 = sphi 0, %s73
      %s88 = sphi 0, %s74
      %s92 = sphi 0, %s92
      %s94 = sphi 0, %s92
      %s95 = sphi 0, %s94
      %s109 = sphi 0, %s95
    $region4: #{tpu_custom_call.1} parent=1 // loop_header_branch
      %19 = sbr.rel (%p17) target = $region8
    $region5: #{tpu_custom_call.1} parent=1 // loop_body
      %s21 = ssub.s32 %s16, 1
      %s22 = ssub.s32 %s16, 2
      %s23 = sadd.s32 %s16, 1
      %s24 = ssub.s32 %s16, %s23
      %p25 = scmp.eq.s32.totalorder %s24, 0
      %s27 = sadd.s32 %s26, 1
      %s28 = scalar_select %p25, %s26, %s27
      %p31 = pneg %p25
      %p32 = scmp.eq.s32.totalorder %s16, 1
      %p33 = por %p31, %p32
      %p34 = scmp.ne.s32.totalorder %s26, %s29
      %p35 = scmp.eq.s32.totalorder %s16, 0
      %p36 = por %p34, %p35
      %p37 = scmp.ne.s32.totalorder %s26, %s29
      %p38 = scmp.eq.s32.totalorder %s21, 1
      %p39 = por %p37, %p38
      %p40 = scmp.ne.s32.totalorder %s29, %s30
      %p41 = scmp.eq.s32.totalorder %s21, 0
      %p42 = por %p40, %p41
      %p43 = scmp.ne.s32.totalorder %s29, %s30
      %p44 = scmp.eq.s32.totalorder %s22, 1
      %p45 = por %p43, %p44
      %p47 = scmp.ne.s32.totalorder %s30, %s46
      %p48 = scmp.eq.s32.totalorder %s22, 0
      %p49 = por %p47, %p48
      %s51 = sadd.s32 %s50, 1
      %p54 = scmp.eq.s32.totalorder %s16, 1
      %p55 = scmp.ne.s32.totalorder %s50, %s52
      %p56 = scmp.eq.s32.totalorder %s16, 0
      %p57 = por %p55, %p56
      %p58 = scmp.ne.s32.totalorder %s50, %s52
      %p59 = scmp.eq.s32.totalorder %s21, 1
      %p60 = por %p58, %p59
      %p61 = scmp.ne.s32.totalorder %s52, %s53
      %p62 = scmp.eq.s32.totalorder %s21, 0
      %p63 = por %p61, %p62
      %p64 = scmp.ne.s32.totalorder %s52, %s53
      %p65 = scmp.eq.s32.totalorder %s22, 1
      %p66 = por %p64, %p65
      %p68 = scmp.ne.s32.totalorder %s53, %s67
      %p69 = scmp.eq.s32.totalorder %s22, 0
      %p70 = por %p68, %p69
      %s72 = sadd.s32 %s71, 1
      %p75 = scmp.eq.s32.totalorder %s16, 1
      %p76 = scmp.ne.s32.totalorder %s71, %s73
      %p77 = scmp.eq.s32.totalorder %s16, 0
      %p78 = por %p76, %p77
      %p79 = scmp.ne.s32.totalorder %s71, %s73
      %p80 = scmp.eq.s32.totalorder %s21, 1
      %p81 = por %p79, %p80
      %p82 = scmp.ne.s32.totalorder %s73, %s74
      %p83 = scmp.eq.s32.totalorder %s21, 0
      %p84 = por %p82, %p83
      %p85 = scmp.ne.s32.totalorder %s73, %s74
      %p86 = scmp.eq.s32.totalorder %s22, 1
      %p87 = por %p85, %p86
      %p89 = scmp.ne.s32.totalorder %s74, %s88
      %p90 = scmp.eq.s32.totalorder %s22, 0
      %p91 = por %p89, %p90
      %s93 = sadd.s32 %s92, 1
      %p96 = scmp.eq.s32.totalorder %s16, 1
      %p97 = scmp.ne.s32.totalorder %s92, %s94
      %p98 = scmp.eq.s32.totalorder %s16, 0
      %p99 = por %p97, %p98
      %p100 = scmp.ne.s32.totalorder %s92, %s94
      %p101 = scmp.eq.s32.totalorder %s21, 1
      %p102 = por %p100, %p101
      %p103 = scmp.ne.s32.totalorder %s94, %s95
      %p104 = scmp.eq.s32.totalorder %s21, 0
      %p105 = por %p103, %p104
      %p106 = scmp.ne.s32.totalorder %s94, %s95
      %p107 = scmp.eq.s32.totalorder %s22, 1
      %p108 = por %p106, %p107
      %p110 = scmp.ne.s32.totalorder %s95, %s109
      %p111 = scmp.eq.s32.totalorder %s22, 0
      %p112 = por %p110, %p111
      %p113 = scmp.le.s32.totalorder 1, %s16
      %p114 = scmp.lt.s32.totalorder %s16, 3
      %p115 = pnand %p113, %p114
      %p116 = pneg %p115
      // Predicated region
      $region9: #{tpu_custom_call.1} parent=5 // pred_check
        _
      $region10: #{tpu_custom_call.1} parent=5 // pred_check_branch
        %118 = sbr.rel (%p115) target = $region12
      $region11: #{tpu_custom_call.1} parent=5 // pred_region
        %s119 = ssub.s32 %s16, 1
        // Predicated region
        $region13: #{tpu_custom_call.1} parent=11 // pred_check
          %p120 = pneg %p63
        $region14: #{tpu_custom_call.1} parent=11 // pred_check_branch
          %122 = sbr.rel (%p120) target = $region16
        $region15: #{tpu_custom_call.1} parent=11 // pred_region
          %s124 = ssub.s32 2048, 2048
          %125 = vsyncadd [#allocation6], %s124
          %s126 = sshll.u32 [#allocation5], 4
          %s127 = int_to_ptr.vmem [resolvable:$true] %s126
          %132 = dma.hbm_to_vmem [thread:$0]  %s1, 2048, %s127, [#allocation6], 128, 128, 8
        $region16: #{tpu_custom_call.1} parent=11 // pred_fallthru
          _
      $region12: #{tpu_custom_call.1} parent=5 // pred_fallthru
        _
      %p133 = scmp.lt.s32.totalorder %s16, 2
      // Predicated region
      $region17: #{tpu_custom_call.1} parent=5 // pred_check
        %p134 = pneg %p133
      $region18: #{tpu_custom_call.1} parent=5 // pred_check_branch
        %136 = sbr.rel (%p134) target = $region20
      $region19: #{tpu_custom_call.1} parent=5 // pred_region
        // Predicated region
        $region21: #{tpu_custom_call.1} parent=19 // pred_check
          %p137 = pneg %p36
        $region22: #{tpu_custom_call.1} parent=19 // pred_check_branch
          %139 = sbr.rel (%p137) target = $region24
        $region23: #{tpu_custom_call.1} parent=19 // pred_region
          %s140 = sand.u32 %s26, 1
          %s141 = scalar_lea.sflag [#allocation3], %s140
          %s142 = sand.u32 %s26, 1
          %s143 = smul.addr %s142, 64
          %s144 = scalar_lea.vmem [#allocation2], %s143
          %s145 = smul.u32 16, %s16
          %s147 = ssub.s32 1024, 1024
          %148 = vsyncadd %s141, %s147
          %s149 = smul.addr %s145, 64
          %s150 = scalar_lea.hbm %s0, %s149
          %s151 = sshll.u32 %s144, 4
          %s152 = int_to_ptr.vmem [resolvable:$true] %s151
          %157 = dma.hbm_to_vmem [thread:$0]  %s150, 1024, %s152, %s141, 64, 64, 4
        $region24: #{tpu_custom_call.1} parent=19 // pred_fallthru
          _
      $region20: #{tpu_custom_call.1} parent=5 // pred_fallthru
        _
      %p158 = scmp.le.s32.totalorder 1, %s16
      %p159 = scmp.lt.s32.totalorder %s16, 3
      %p160 = pnand %p158, %p159
      %p161 = pneg %p160
      // Predicated region
      $region25: #{tpu_custom_call.1} parent=5 // pred_check
        _
      $region26: #{tpu_custom_call.1} parent=5 // pred_check_branch
        %163 = sbr.rel (%p160) target = $region28
      $region27: #{tpu_custom_call.1} parent=5 // pred_region
        %s164 = ssub.s32 %s16, 1
        %s165 = sand.u32 %s29, 1
        %s166 = scalar_lea.sflag [#allocation3], %s165
        %s167 = sand.u32 %s29, 1
        %s168 = smul.addr %s167, 64
        %s169 = scalar_lea.vmem [#allocation2], %s168
        // Predicated region
        $region29: #{tpu_custom_call.1} parent=27 // pred_check
          %p170 = pneg %p42
        $region30: #{tpu_custom_call.1} parent=27 // pred_check_branch
          %172 = sbr.rel (%p170) target = $region32
        $region31: #{tpu_custom_call.1} parent=27 // pred_region
          %173 = dma.done %s166, 1024
        $region32: #{tpu_custom_call.1} parent=27 // pred_fallthru
          _
        // Predicated region
        $region33: #{tpu_custom_call.1} parent=27 // pred_check
          %p174 = pneg %p63
        $region34: #{tpu_custom_call.1} parent=27 // pred_check_branch
          %176 = sbr.rel (%p174) target = $region36
        $region35: #{tpu_custom_call.1} parent=27 // pred_region
          %177 = dma.done [#allocation6], 2048
        $region36: #{tpu_custom_call.1} parent=27 // pred_fallthru
          _
        %s178 = sand.u32 %s29, 1
        %s179 = scalar_lea.sflag [#allocation3], %s178
        %s180 = sand.u32 %s29, 1
        %s181 = smul.addr %s180, 64
        %s182 = scalar_lea.vmem [#allocation2], %s181
        %p183 = pneg %p42
        %p184 = pneg %p39
        %p185 = pneg %p63
        %p186 = pneg %p60
        %p187 = pneg %p84
        %p188 = pneg %p81
        %p189 = pneg %p105
        %p190 = pneg %p102
        %s191 = smul.u32 16, %s21
        %v193 = vld [vmem:[%s169] sm:$0xf]
        %v194 = vld [vmem:[%s169 + $0x4] sm:$0xf]
        %v195 = vld [vmem:[%s169 + $0x8] sm:$0xf]
        %v196 = vld [vmem:[%s169 + $0xc] sm:$0xf]
        %v197 = vld [vmem:[%s169 + $0x10] sm:$0xf]
        %v198 = vld [vmem:[%s169 + $0x14] sm:$0xf]
        %v199 = vld [vmem:[%s169 + $0x18] sm:$0xf]
        %v200 = vld [vmem:[%s169 + $0x1c] sm:$0xf]
        %v201 = vld [vmem:[%s169 + $0x20] sm:$0xf]
        %v202 = vld [vmem:[%s169 + $0x24] sm:$0xf]
        %v203 = vld [vmem:[%s169 + $0x28] sm:$0xf]
        %v204 = vld [vmem:[%s169 + $0x2c] sm:$0xf]
        %v205 = vld [vmem:[%s169 + $0x30] sm:$0xf]
        %v206 = vld [vmem:[%s169 + $0x34] sm:$0xf]
        %v207 = vld [vmem:[%s169 + $0x38] sm:$0xf]
        %v208 = vld [vmem:[%s169 + $0x3c] sm:$0xf]
        %v209 = vld [vmem:[#allocation5] sm:$0xff]
        %v210 = vld [vmem:[#allocation5 + $0x8] sm:$0xff]
        %v211 = vld [vmem:[#allocation5 + $0x10] sm:$0xff]
        %v212 = vld [vmem:[#allocation5 + $0x18] sm:$0xff]
        %v213 = vld [vmem:[#allocation5 + $0x20] sm:$0xff]
        %v214 = vld [vmem:[#allocation5 + $0x28] sm:$0xff]
        %v215 = vld [vmem:[#allocation5 + $0x30] sm:$0xff]
        %v216 = vld [vmem:[#allocation5 + $0x38] sm:$0xff]
        %v217 = vld [vmem:[#allocation5 + $0x40] sm:$0xff]
        %v218 = vld [vmem:[#allocation5 + $0x48] sm:$0xff]
        %v219 = vld [vmem:[#allocation5 + $0x50] sm:$0xff]
        %v220 = vld [vmem:[#allocation5 + $0x58] sm:$0xff]
        %v221 = vld [vmem:[#allocation5 + $0x60] sm:$0xff]
        %v222 = vld [vmem:[#allocation5 + $0x68] sm:$0xff]
        %v223 = vld [vmem:[#allocation5 + $0x70] sm:$0xff]
        %v224 = vld [vmem:[#allocation5 + $0x78] sm:$0xff]
        %v241 = vunpack.c.l.b16 %v193
        %v242 = vunpack.c.l.b16 %v194
        %v243 = vunpack.c.l.b16 %v195
        %v244 = vunpack.c.l.b16 %v196
        %v245 = vunpack.c.l.b16 %v197
        %v246 = vunpack.c.l.b16 %v198
        %v247 = vunpack.c.l.b16 %v199
        %v248 = vunpack.c.l.b16 %v200
        %v249 = vunpack.c.l.b16 %v201
        %v250 = vunpack.c.l.b16 %v202
        %v251 = vunpack.c.l.b16 %v203
        %v252 = vunpack.c.l.b16 %v204
        %v253 = vunpack.c.l.b16 %v205
        %v254 = vunpack.c.l.b16 %v206
        %v255 = vunpack.c.l.b16 %v207
        %v256 = vunpack.c.l.b16 %v208
        %v257 = vpack.c.b16 %v242, %v241
        %v258 = vpack.c.b16 %v244, %v243
        %v259 = vpack.c.b16 %v246, %v245
        %v260 = vpack.c.b16 %v248, %v247
        %v261 = vpack.c.b16 %v250, %v249
        %v262 = vpack.c.b16 %v252, %v251
        %v263 = vpack.c.b16 %v254, %v253
        %v264 = vpack.c.b16 %v256, %v255
        %v289 = vunpack.c.l.b16 %v209
        %v290 = vunpack.c.h.b16 %v209
        %v291 = vunpack.c.l.b16 %v210
        %v292 = vunpack.c.h.b16 %v210
        %v293 = vunpack.c.l.b16 %v211
        %v294 = vunpack.c.h.b16 %v211
        %v295 = vunpack.c.l.b16 %v212
        %v296 = vunpack.c.h.b16 %v212
        %v297 = vunpack.c.l.b16 %v213
        %v298 = vunpack.c.h.b16 %v213
        %v299 = vunpack.c.l.b16 %v214
        %v300 = vunpack.c.h.b16 %v214
        %v301 = vunpack.c.l.b16 %v215
        %v302 = vunpack.c.h.b16 %v215
        %v303 = vunpack.c.l.b16 %v216
        %v304 = vunpack.c.h.b16 %v216
        %v305 = vunpack.c.l.b16 %v217
        %v306 = vunpack.c.h.b16 %v217
        %v307 = vunpack.c.l.b16 %v218
        %v308 = vunpack.c.h.b16 %v218
        %v309 = vunpack.c.l.b16 %v219
        %v310 = vunpack.c.h.b16 %v219
        %v311 = vunpack.c.l.b16 %v220
        %v312 = vunpack.c.h.b16 %v220
        %v313 = vunpack.c.l.b16 %v221
        %v314 = vunpack.c.h.b16 %v221
        %v315 = vunpack.c.l.b16 %v222
        %v316 = vunpack.c.h.b16 %v222
        %v317 = vunpack.c.l.b16 %v223
        %v318 = vunpack.c.h.b16 %v223
        %v319 = vunpack.c.l.b16 %v224
        %v320 = vunpack.c.h.b16 %v224
        %v321 = vpack.c.b16 %v291, %v289
        %v322 = vpack.c.b16 %v292, %v290
        %v323 = vpack.c.b16 %v295, %v293
        %v324 = vpack.c.b16 %v296, %v294
        %v325 = vpack.c.b16 %v299, %v297
        %v326 = vpack.c.b16 %v300, %v298
        %v327 = vpack.c.b16 %v303, %v301
        %v328 = vpack.c.b16 %v304, %v302
        %v329 = vpack.c.b16 %v307, %v305
        %v330 = vpack.c.b16 %v308, %v306
        %v331 = vpack.c.b16 %v311, %v309
        %v332 = vpack.c.b16 %v312, %v310
        %v333 = vpack.c.b16 %v315, %v313
        %v334 = vpack.c.b16 %v316, %v314
        %v335 = vpack.c.b16 %v319, %v317
        %v336 = vpack.c.b16 %v320, %v318
        %353 = vmatprep.subr.bf16.mxu0 %v322
        %354 = vmatpush1.bf16.msra.mxu0 %v321
        %355 = vmatprep.subr.bf16.mxu0 %v324
        %356 = vmatpush1.bf16.msra.mxu0 %v323
        %357 = vmatprep.subr.bf16.mxu0 %v326
        %358 = vmatpush1.bf16.msra.mxu0 %v325
        %359 = vmatprep.subr.bf16.mxu0 %v328
        %360 = vmatpush1.bf16.msra.mxu0 %v327
        %361 = vmatprep.subr.bf16.mxu0 %v330
        %362 = vmatpush1.bf16.msra.mxu0 %v329
        %363 = vmatprep.subr.bf16.mxu0 %v332
        %364 = vmatpush1.bf16.msra.mxu0 %v331
        %365 = vmatprep.subr.bf16.mxu0 %v334
        %366 = vmatpush1.bf16.msra.mxu0 %v333
        %367 = vmatprep.subr.bf16.mxu0 %v336
        %368 = vmatpush1.bf16.msra.mxu0 %v335
        %369 = vmatprep.subr.bf16.mxu0 0
        %370 = vmatpush1.bf16.msra.mxu0 0
        %371 = vmatprep.subr.bf16.mxu0 0
        %372 = vmatpush1.bf16.msra.mxu0 0
        %373 = vmatprep.subr.bf16.mxu0 0
        %374 = vmatpush1.bf16.msra.mxu0 0
        %375 = vmatprep.subr.bf16.mxu0 0
        %376 = vmatpush1.bf16.msra.mxu0 0
        %377 = vmatprep.subr.bf16.mxu0 0
        %378 = vmatpush1.bf16.msra.mxu0 0
        %379 = vmatprep.subr.bf16.mxu0 0
        %380 = vmatpush1.bf16.msra.mxu0 0
        %381 = vmatprep.subr.bf16.mxu0 0
        %382 = vmatpush1.bf16.msra.mxu0 0
        %383 = vmatprep.subr.bf16.mxu0 0
        %384 = vmatpush1.bf16.msra.mxu0 0
        %385 = vmatprep.mubr.bf16.mxu0 0
        %386 = vmatmul.mubr.bf16.gmra.mrb[0].mxu0 %v257
        %v387 = vpop.f32.mrb[0].mxu0
        %v388 = vadd.f32 0.0, %v387
        %v389 = vpop.f32.mrb[0].mxu0
        %v390 = vadd.f32 0.0, %v389
        %v391 = vpop.f32.mrb[0].mxu0
        %v392 = vadd.f32 0.0, %v391
        %v393 = vpop.f32.mrb[0].mxu0
        %v394 = vadd.f32 0.0, %v393
        %395 = vmatprep.mubr.bf16.mxu0 0
        %396 = vmatmul.mubr.bf16.gmra.mrb[0].mxu0 %v258
        %v397 = vpop.f32.mrb[0].mxu0
        %v398 = vadd.f32 0.0, %v397
        %v399 = vpop.f32.mrb[0].mxu0
        %v400 = vadd.f32 0.0, %v399
        %v401 = vpop.f32.mrb[0].mxu0
        %v402 = vadd.f32 0.0, %v401
        %v403 = vpop.f32.mrb[0].mxu0
        %v404 = vadd.f32 0.0, %v403
        %405 = vmatprep.mubr.bf16.mxu0 0
        %406 = vmatmul.mubr.bf16.gmra.mrb[0].mxu0 %v259
        %v407 = vpop.f32.mrb[0].mxu0
        %v408 = vadd.f32 0.0, %v407
        %v409 = vpop.f32.mrb[0].mxu0
        %v410 = vadd.f32 0.0, %v409
        %v411 = vpop.f32.mrb[0].mxu0
        %v412 = vadd.f32 0.0, %v411
        %v413 = vpop.f32.mrb[0].mxu0
        %v414 = vadd.f32 0.0, %v413
        %415 = vmatprep.mubr.bf16.mxu0 0
        %416 = vmatmul.mubr.bf16.gmra.mrb[0].mxu0 %v260
        %v417 = vpop.f32.mrb[0].mxu0
        %v418 = vadd.f32 0.0, %v417
        %v419 = vpop.f32.mrb[0].mxu0
        %v420 = vadd.f32 0.0, %v419
        %v421 = vpop.f32.mrb[0].mxu0
        %v422 = vadd.f32 0.0, %v421
        %v423 = vpop.f32.mrb[0].mxu0
        %v424 = vadd.f32 0.0, %v423
        %425 = vmatprep.mubr.bf16.mxu0 0
        %426 = vmatmul.mubr.bf16.gmra.mrb[0].mxu0 %v261
        %v427 = vpop.f32.mrb[0].mxu0
        %v428 = vadd.f32 0.0, %v427
        %v429 = vpop.f32.mrb[0].mxu0
        %v430 = vadd.f32 0.0, %v429
        %v431 = vpop.f32.mrb[0].mxu0
        %v432 = vadd.f32 0.0, %v431
        %v433 = vpop.f32.mrb[0].mxu0
        %v434 = vadd.f32 0.0, %v433
        %435 = vmatprep.mubr.bf16.mxu0 0
        %436 = vmatmul.mubr.bf16.gmra.mrb[0].mxu0 %v262
        %v437 = vpop.f32.mrb[0].mxu0
        %v438 = vadd.f32 0.0, %v437
        %v439 = vpop.f32.mrb[0].mxu0
        %v440 = vadd.f32 0.0, %v439
        %v441 = vpop.f32.mrb[0].mxu0
        %v442 = vadd.f32 0.0, %v441
        %v443 = vpop.f32.mrb[0].mxu0
        %v444 = vadd.f32 0.0, %v443
        %445 = vmatprep.mubr.bf16.mxu0 0
        %446 = vmatmul.mubr.bf16.gmra.mrb[0].mxu0 %v263
        %v447 = vpop.f32.mrb[0].mxu0
        %v448 = vadd.f32 0.0, %v447
        %v449 = vpop.f32.mrb[0].mxu0
        %v450 = vadd.f32 0.0, %v449
        %v451 = vpop.f32.mrb[0].mxu0
        %v452 = vadd.f32 0.0, %v451
        %v453 = vpop.f32.mrb[0].mxu0
        %v454 = vadd.f32 0.0, %v453
        %455 = vmatprep.mubr.bf16.mxu0 0
        %456 = vmatmul.mubr.bf16.gmra.mrb[0].mxu0 %v264
        %v457 = vpop.f32.mrb[0].mxu0
        %v458 = vadd.f32 0.0, %v457
        %v459 = vpop.f32.mrb[0].mxu0
        %v460 = vadd.f32 0.0, %v459
        %v461 = vpop.f32.mrb[0].mxu0
        %v462 = vadd.f32 0.0, %v461
        %v463 = vpop.f32.mrb[0].mxu0
        %v464 = vadd.f32 0.0, %v463
        %465 = vdwg.mxu0
        %p466 = scmp.eq.s32.totalorder %s21, 0
        // Predicated region
        $region37: #{tpu_custom_call.1} parent=27 // pred_check
          %p467 = pneg %p466
        $region38: #{tpu_custom_call.1} parent=27 // pred_check_branch
          %469 = sbr.rel (%p467) target = $region40
        $region39: #{tpu_custom_call.1} parent=27 // pred_region
          %v470 = vlaneseq
          %vm471 = vcmp.ge.s32.totalorder %v470, 0
          %vm472 = vcmp.lt.s32.totalorder %v470, 256
          %vm473 = vmand %vm471, %vm472
          %474 = vst.msk [vmem:[#allocation7] sm:$0x3] %vm473, 0.0
          %475 = vst.msk [vmem:[#allocation8] sm:$0x3] %vm473, 0.0
        $region40: #{tpu_custom_call.1} parent=27 // pred_fallthru
          _
        %v476 = vld [vmem:[#allocation7] sm:$0x3]
        %v477 = vadd.f32 %v388, %v392
        %v478 = vadd.f32 %v477, %v398
        %v479 = vadd.f32 %v478, %v402
        %v480 = vadd.f32 %v479, %v408
        %v481 = vadd.f32 %v480, %v412
        %v482 = vadd.f32 %v481, %v418
        %v483 = vadd.f32 %v482, %v422
        %v484 = vadd.f32 %v483, %v428
        %v485 = vadd.f32 %v484, %v432
        %v486 = vadd.f32 %v485, %v438
        %v487 = vadd.f32 %v486, %v442
        %v488 = vadd.f32 %v487, %v448
        %v489 = vadd.f32 %v488, %v452
        %v490 = vadd.f32 %v489, %v458
        %v491 = vadd.f32 %v490, %v462
        %v492 = vrot.slane %v491, 4
        %v493 = vadd.f32 %v491, %v492
        %v494 = vrot.slane %v493, 2
        %v495 = vadd.f32 %v493, %v494
        %v496 = vrot.slane %v495, 1
        %v497 = vadd.f32 %v495, %v496
        %v498 = vadd.f32 %v390, %v394
        %v499 = vadd.f32 %v498, %v400
        %v500 = vadd.f32 %v499, %v404
        %v501 = vadd.f32 %v500, %v410
        %v502 = vadd.f32 %v501, %v414
        %v503 = vadd.f32 %v502, %v420
        %v504 = vadd.f32 %v503, %v424
        %v505 = vadd.f32 %v504, %v430
        %v506 = vadd.f32 %v505, %v434
        %v507 = vadd.f32 %v506, %v440
        %v508 = vadd.f32 %v507, %v444
        %v509 = vadd.f32 %v508, %v450
        %v510 = vadd.f32 %v509, %v454
        %v511 = vadd.f32 %v510, %v460
        %v512 = vadd.f32 %v511, %v464
        %v513 = vrot.slane %v512, 4
        %v514 = vadd.f32 %v512, %v513
        %v515 = vrot.slane %v514, 2
        %v516 = vadd.f32 %v514, %v515
        %v517 = vrot.slane %v516, 1
        %v518 = vadd.f32 %v516, %v517
        %v521 = vcombine.low %v497, %v518
        %v523 = vunpack.c.l.s4 1966171168
        %v524 = vunpack.c.0.s8 %v523
        %v525 = vlaneseq
        %v526 = vshrl.u32 %v525, 7
        %v527 = vsub.s32 %v524, %v526
        %v528 = vrot.slane %v521, %v527
        %v530 = vunpack.c.l.s4 1966171168
        %v531 = vunpack.c.0.s8 %v530
        %v532 = vlaneseq
        %v533 = vshrl.u32 %v532, 7
        %v534 = vsub.s32 %v531, %v533
        %v535 = vrot.slane %v528, %v534
        %v537 = vadd.f32 %v476, %v535
        %v538 = vlaneseq
        %vm539 = vcmp.ge.s32.totalorder %v538, 0
        %vm540 = vcmp.lt.s32.totalorder %v538, 256
        %vm541 = vmand %vm539, %vm540
        %542 = vst.msk [vmem:[#allocation7] sm:$0x3] %vm541, %v537
        %v543 = vld [vmem:[#allocation8] sm:$0x3]
        %v544 = vmul.f32 %v388, %v388
        %v545 = vmul.f32 %v390, %v390
        %v546 = vmul.f32 %v392, %v392
        %v547 = vmul.f32 %v394, %v394
        %v548 = vmul.f32 %v398, %v398
        %v549 = vmul.f32 %v400, %v400
        %v550 = vmul.f32 %v402, %v402
        %v551 = vmul.f32 %v404, %v404
        %v552 = vmul.f32 %v408, %v408
        %v553 = vmul.f32 %v410, %v410
        %v554 = vmul.f32 %v412, %v412
        %v555 = vmul.f32 %v414, %v414
        %v556 = vmul.f32 %v418, %v418
        %v557 = vmul.f32 %v420, %v420
        %v558 = vmul.f32 %v422, %v422
        %v559 = vmul.f32 %v424, %v424
        %v560 = vmul.f32 %v428, %v428
        %v561 = vmul.f32 %v430, %v430
        %v562 = vmul.f32 %v432, %v432
        %v563 = vmul.f32 %v434, %v434
        %v564 = vmul.f32 %v438, %v438
        %v565 = vmul.f32 %v440, %v440
        %v566 = vmul.f32 %v442, %v442
        %v567 = vmul.f32 %v444, %v444
        %v568 = vmul.f32 %v448, %v448
        %v569 = vmul.f32 %v450, %v450
        %v570 = vmul.f32 %v452, %v452
        %v571 = vmul.f32 %v454, %v454
        %v572 = vmul.f32 %v458, %v458
        %v573 = vmul.f32 %v460, %v460
        %v574 = vmul.f32 %v462, %v462
        %v575 = vmul.f32 %v464, %v464
        %v576 = vadd.f32 %v544, %v546
        %v577 = vadd.f32 %v576, %v548
        %v578 = vadd.f32 %v577, %v550
        %v579 = vadd.f32 %v578, %v552
        %v580 = vadd.f32 %v579, %v554
        %v581 = vadd.f32 %v580, %v556
        %v582 = vadd.f32 %v581, %v558
        %v583 = vadd.f32 %v582, %v560
        %v584 = vadd.f32 %v583, %v562
        %v585 = vadd.f32 %v584, %v564
        %v586 = vadd.f32 %v585, %v566
        %v587 = vadd.f32 %v586, %v568
        %v588 = vadd.f32 %v587, %v570
        %v589 = vadd.f32 %v588, %v572
        %v590 = vadd.f32 %v589, %v574
        %v591 = vrot.slane %v590, 4
        %v592 = vadd.f32 %v590, %v591
        %v593 = vrot.slane %v592, 2
        %v594 = vadd.f32 %v592, %v593
        %v595 = vrot.slane %v594, 1
        %v596 = vadd.f32 %v594, %v595
        %v597 = vadd.f32 %v545, %v547
        %v598 = vadd.f32 %v597, %v549
        %v599 = vadd.f32 %v598, %v551
        %v600 = vadd.f32 %v599, %v553
        %v601 = vadd.f32 %v600, %v555
        %v602 = vadd.f32 %v601, %v557
        %v603 = vadd.f32 %v602, %v559
        %v604 = vadd.f32 %v603, %v561
        %v605 = vadd.f32 %v604, %v563
        %v606 = vadd.f32 %v605, %v565
        %v607 = vadd.f32 %v606, %v567
        %v608 = vadd.f32 %v607, %v569
        %v609 = vadd.f32 %v608, %v571
        %v610 = vadd.f32 %v609, %v573
        %v611 = vadd.f32 %v610, %v575
        %v612 = vrot.slane %v611, 4
        %v613 = vadd.f32 %v611, %v612
        %v614 = vrot.slane %v613, 2
        %v615 = vadd.f32 %v613, %v614
        %v616 = vrot.slane %v615, 1
        %v617 = vadd.f32 %v615, %v616
        %v620 = vcombine.low %v596, %v617
        %v622 = vunpack.c.l.s4 1966171168
        %v623 = vunpack.c.0.s8 %v622
        %v624 = vlaneseq
        %v625 = vshrl.u32 %v624, 7
        %v626 = vsub.s32 %v623, %v625
        %v627 = vrot.slane %v620, %v626
        %v629 = vunpack.c.l.s4 1966171168
        %v630 = vunpack.c.0.s8 %v629
        %v631 = vlaneseq
        %v632 = vshrl.u32 %v631, 7
        %v633 = vsub.s32 %v630, %v632
        %v634 = vrot.slane %v627, %v633
        %v636 = vadd.f32 %v543, %v634
        %637 = vst.msk [vmem:[#allocation8] sm:$0x3] %vm541, %v636
        // Predicated region
        $region41: #{tpu_custom_call.1} parent=27 // pred_check
          %p638 = pneg %p81
        $region42: #{tpu_custom_call.1} parent=27 // pred_check_branch
          %640 = sbr.rel (%p638) target = $region44
        $region43: #{tpu_custom_call.1} parent=27 // pred_region
          %s642 = ssub.s32 32, 32
          %643 = vsyncadd [#allocation4], %s642
          %s645 = sshll.u32 [#allocation7], 4
          %s646 = int_to_ptr.vmem [resolvable:$true] %s645
          %648 = dma.vmem_to_hbm [thread:$0]  %s646, 32, %s2, [#allocation4]
        $region44: #{tpu_custom_call.1} parent=27 // pred_fallthru
          _
        // Predicated region
        $region45: #{tpu_custom_call.1} parent=27 // pred_check
          %p649 = pneg %p102
        $region46: #{tpu_custom_call.1} parent=27 // pred_check_branch
          %651 = sbr.rel (%p649) target = $region48
        $region47: #{tpu_custom_call.1} parent=27 // pred_region
          %s653 = ssub.s32 32, 32
          %654 = vsyncadd [#allocation9], %s653
          %s656 = sshll.u32 [#allocation8], 4
          %s657 = int_to_ptr.vmem [resolvable:$true] %s656
          %659 = dma.vmem_to_hbm [thread:$0]  %s657, 32, %s3, [#allocation9]
        $region48: #{tpu_custom_call.1} parent=27 // pred_fallthru
          _
        // Predicated region
        $region49: #{tpu_custom_call.1} parent=27 // pred_check
          %p660 = pneg %p81
        $region50: #{tpu_custom_call.1} parent=27 // pred_check_branch
          %662 = sbr.rel (%p660) target = $region52
        $region51: #{tpu_custom_call.1} parent=27 // pred_region
          %663 = dma.done [#allocation4], 32
        $region52: #{tpu_custom_call.1} parent=27 // pred_fallthru
          _
        // Predicated region
        $region53: #{tpu_custom_call.1} parent=27 // pred_check
          %p664 = pneg %p102
        $region54: #{tpu_custom_call.1} parent=27 // pred_check_branch
          %666 = sbr.rel (%p664) target = $region56
        $region55: #{tpu_custom_call.1} parent=27 // pred_region
          %667 = dma.done [#allocation9], 32
        $region56: #{tpu_custom_call.1} parent=27 // pred_fallthru
          _
      $region28: #{tpu_custom_call.1} parent=5 // pred_fallthru
        _
      %p668 = scmp.le.s32.totalorder 2, %s16
      // Predicated region
      $region57: #{tpu_custom_call.1} parent=5 // pred_check
        %p669 = pneg %p668
      $region58: #{tpu_custom_call.1} parent=5 // pred_check_branch
        %671 = sbr.rel (%p669) target = $region60
      $region59: #{tpu_custom_call.1} parent=5 // pred_region
        %s672 = ssub.s32 %s16, 2
      $region60: #{tpu_custom_call.1} parent=5 // pred_fallthru
        _
    $region6: #{tpu_custom_call.1} parent=1 // loop_footer
      %s20 = sadd.s32 1, %s16
    $region7: #{tpu_custom_call.1} parent=1 // loop_footer_branch
      %15 = sbr.rel target = $region3
    $region8: #{tpu_custom_call.1} parent=1 // loop_exit
      _
    %673 = vsyncpa [#allocation3], 1
    %s674 = scalar_lea.sflag [#allocation3], 1
    %675 = vsyncpa %s674, 1
    %676 = vsyncpa [#allocation6], 1
    %677 = vsyncpa [#allocation4], 1
    %s678 = scalar_lea.sflag [#allocation4], 1
    %679 = vsyncpa %s678, 1
    %680 = vsyncpa [#allocation9], 1

</llo_original>
